<compile_context>
chip_gen: v7x
topology: tpu7x:2x2x1
jax: 0.10.0
libtpu: 0.0.40
codegen_flags: <defaults>
</compile_context>

<pallas_src>
import functools

import jax
import jax.numpy as jnp
from jax.experimental import pallas as pl
from jax.experimental.pallas import tpu as pltpu


def _make_dilconv_kernel(*, Hp, Wp, C_in, C_out, KH, KW, stride, dilation, TH, W_out):
    """Kernel for one (batch element, H-tile) grid step."""
    TH_in = (TH - 1) * stride + (KH - 1) * dilation + 1     # input rows needed per tile
    K_eff = KH * KW * C_in                                  # folded contraction length

    def kernel(x_ref, w_ref, b_ref, o_ref, patch_ref):
        # x_ref:     (1, Hp, Wp, C_in)        zero-padded NHWC input (whole image)
        # w_ref:     (K_eff, C_out)           folded depthwise*pointwise*BN-scale weight
        # b_ref:     (1, C_out)               folded BN bias
        # o_ref:     (1, TH, W_out, C_out)    output tile
        # patch_ref: (TH*W_out, K_eff)        VMEM im2col scratch

        # Rows of the padded input covering this output H-tile.
        h0 = pl.multiple_of(pl.program_id(1) * (TH * stride), TH * stride)
        win = x_ref[0, pl.ds(h0, TH_in), :, :]               # (TH_in, Wp, C_in)
        # ReLU once per tile (relu(0) == 0, so it commutes with zero-padding).
        win = jnp.maximum(win.astype(jnp.float32), 0.0)

        # im2col: write the KH*KW shifted taps into the patch scratch.  All
        # reshapes below keep the lane (channel) dimension unchanged.
        # NOTE: for stride > 1 these are value-level strided slices; for best
        # perf at stride 2 the even/odd subsampling should be hoisted into the
        # DMA / a one-time split (the test config uses stride == 1).
        for i in range(KH):
            for j in range(KW):
                tap = win[i * dilation: i * dilation + (TH - 1) * stride + 1: stride,
                          j * dilation: j * dilation + (W_out - 1) * stride + 1: stride,
                          :]                                  # (TH, W_out, C_in)
                t = i * KW + j
                patch_ref[:, t * C_in:(t + 1) * C_in] = tap.reshape(TH * W_out, C_in)

        # ReLU->depthwise->pointwise->BN collapses into ONE MXU matmul + bias.
        y = jnp.dot(patch_ref[...], w_ref[...],
                    preferred_element_type=jnp.float32) + b_ref[...]
        o_ref[0] = y.reshape(TH, W_out, C_out).astype(o_ref.dtype)

    return kernel


@functools.partial(jax.jit, static_argnames=("kernel_size", "stride", "padding", "dilation"))
def dil_conv_forward(x_nchw, dw_w, pw_w, gamma, beta, running_mean, running_var,
                     *, kernel_size, stride, padding, dilation, eps=1e-5):
    """Forward pass of DilConv. x_nchw: (N, C_in, H, W) float32."""
    N, C_in, H, W = x_nchw.shape
    C_out = pw_w.shape[0]
    KH = KW = kernel_size

    H_out = (H + 2 * padding - dilation * (KH - 1) - 1) // stride + 1
    W_out = (W + 2 * padding - dilation * (KW - 1) - 1) // stride + 1
    Hp, Wp = H + 2 * padding, W + 2 * padding

    # NCHW -> NHWC and zero-pad (XLA fuses these into a single copy pass).
    x = jnp.transpose(x_nchw, (0, 2, 3, 1))
    x = jnp.pad(x, ((0, 0), (padding, padding), (padding, padding), (0, 0)))

    # Fold depthwise * pointwise * BN-scale into one (KH*KW*C_in, C_out) weight
    # and fold the BN shift into a single bias: kernel = im2col + dot + add.
    scale = gamma / jnp.sqrt(running_var + eps)                      # (C_out,)
    dw = jnp.transpose(dw_w[:, 0, :, :], (1, 2, 0))                  # (KH, KW, C_in)
    pw = jnp.transpose(pw_w[:, :, 0, 0], (1, 0)) * scale[None, :]    # (C_in, C_out)
    w_eff = (dw[:, :, :, None] * pw[None, None, :, :]).reshape(KH * KW * C_in, C_out)
    b_eff = (beta - running_mean * scale).reshape(1, C_out)

    # H-tile: gives >= 4 grid steps for pipelining and bounds the per-step
    # output/compute footprint.  (8,128) rule: last two block dims equal the
    # full array dims, so any TH that divides H_out is legal.
    TH = 8 if H_out % 8 == 0 else H_out
    HT = H_out // TH

    kernel = _make_dilconv_kernel(Hp=Hp, Wp=Wp, C_in=C_in, C_out=C_out,
                                  KH=KH, KW=KW, stride=stride, dilation=dilation,
                                  TH=TH, W_out=W_out)

    out_nhwc = pl.pallas_call(
        kernel,
        out_shape=jax.ShapeDtypeStruct((N, H_out, W_out, C_out), x_nchw.dtype),
        grid_spec=pltpu.PrefetchScalarGridSpec(
            num_scalar_prefetch=0,
            grid=(N, HT),
            in_specs=[
                # Whole padded image per batch element; block index is constant
                # across the h axis, so it is DMA'd once per n and
                # double-buffered across n.
                pl.BlockSpec((1, Hp, Wp, C_in), lambda n, h: (n, 0, 0, 0)),
                pl.BlockSpec((KH * KW * C_in, C_out), lambda n, h: (0, 0)),
                pl.BlockSpec((1, C_out), lambda n, h: (0, 0)),
            ],
            out_specs=pl.BlockSpec((1, TH, W_out, C_out), lambda n, h: (n, h, 0, 0)),
            scratch_shapes=[pltpu.VMEM((TH * W_out, KH * KW * C_in), jnp.float32)],
        ),
        compiler_params=pltpu.CompilerParams(
            dimension_semantics=("parallel", "parallel"),
            vmem_limit_bytes=32 * 1024 * 1024,
        ),
    )(x, w_eff, b_eff)

    return jnp.transpose(out_nhwc, (0, 3, 1, 2))          # back to NCHW


def _reference_forward(x, dw_w, pw_w, gamma, beta, mean, var,
                       *, stride, padding, dilation, eps=1e-5):
    """Pure-JAX reference (lax.conv_general_dilated), NCHW."""
    h = jax.nn.relu(x)
    h = jax.lax.conv_general_dilated(
        h, dw_w, window_strides=(stride, stride),
        padding=[(padding, padding), (padding, padding)],
        rhs_dilation=(dilation, dilation),
        dimension_numbers=("NCHW", "OIHW", "NCHW"),
        feature_group_count=x.shape[1])
    h = jax.lax.conv_general_dilated(
        h, pw_w, window_strides=(1, 1), padding=[(0, 0), (0, 0)],
        dimension_numbers=("NCHW", "OIHW", "NCHW"))
    s = gamma / jnp.sqrt(var + eps)
    return h * s[None, :, None, None] + (beta - mean * s)[None, :, None, None]


if __name__ == "__main__":
    # Small DilConv config: C_in=4, C_out=8, 3x3 depthwise, stride=1, pad=2, dil=2.
    N, C_in, C_out, H, W = 2, 4, 8, 16, 16
    kernel_size, stride, padding, dilation = 3, 1, 2, 2

    key = jax.random.PRNGKey(0)
    k_x, k_dw, k_pw, k_g, k_b, k_m, k_v = jax.random.split(key, 7)

    x = jax.random.normal(k_x, (N, C_in, H, W), jnp.float32)
    # Depthwise conv weight: (C_in, 1, kH, kW); pointwise: (C_out, C_in, 1, 1).
    dw_w = 0.3 * jax.random.normal(k_dw, (C_in, 1, kernel_size, kernel_size), jnp.float32)
    pw_w = 0.3 * jax.random.normal(k_pw, (C_out, C_in, 1, 1), jnp.float32)
    # BatchNorm (affine=True), deterministic synthetic stats, inference mode.
    # TODO(synk): training-mode BN (batch-statistics update) is not implemented.
    gamma = 1.0 + 0.1 * jax.random.normal(k_g, (C_out,), jnp.float32)
    beta = 0.1 * jax.random.normal(k_b, (C_out,), jnp.float32)
    running_mean = 0.1 * jax.random.normal(k_m, (C_out,), jnp.float32)
    running_var = 0.5 + jnp.abs(jax.random.normal(k_v, (C_out,), jnp.float32))

    out = dil_conv_forward(x, dw_w, pw_w, gamma, beta, running_mean, running_var,
                           kernel_size=kernel_size, stride=stride,
                           padding=padding, dilation=dilation)
    out = jax.block_until_ready(out)

    ref = _reference_forward(x, dw_w, pw_w, gamma, beta, running_mean, running_var,
                             stride=stride, padding=padding, dilation=dilation)
    assert out.shape == ref.shape == (N, C_out, H, W)
    assert jnp.allclose(out, ref, atol=1e-4, rtol=1e-4), "mismatch vs reference"

    print("KERNEL_OK")
</pallas_src>

<mosaic_0001>
module attributes {stable_mosaic.version = 11 : i64} {
  func.func @kernel(%arg0: i32, %arg1: i32, %arg2: memref<1x20x20x4xf32, #tpu.memory_space<vmem>>, %arg3: memref<36x8xf32, #tpu.memory_space<vmem>>, %arg4: memref<1x8xf32, #tpu.memory_space<vmem>>, %arg5: memref<1x8x16x8xf32, #tpu.memory_space<vmem>>, %arg6: memref<128x36xf32, #tpu.memory_space<vmem>>) attributes {dimension_semantics = [#tpu.dimension_semantics<parallel>, #tpu.dimension_semantics<parallel>], iteration_bounds = array<i64: 2, 2>, scalar_prefetch = 0 : i64, scratch_operands = 1 : i64, tpu.core_type = #tpu.core_type<tc>, window_params = [{transform_indices = @transform_0, window_bounds = array<i64: 1, 20, 20, 4>}, {pipeline_mode = #tpu.pipeline_mode<synchronous>, transform_indices = @transform_1, window_bounds = array<i64: 36, 8>}, {pipeline_mode = #tpu.pipeline_mode<synchronous>, transform_indices = @transform_2, window_bounds = array<i64: 1, 8>}, {transform_indices = @transform_3, window_bounds = array<i64: 1, 8, 16, 8>}]} {
    %c8_i32 = arith.constant 8 : i32
    %0 = arith.muli %arg1, %c8_i32 : i32
    %1 = tpu.assume_multiple %0, 8 : i32
    %c0 = arith.constant 0 : index
    %2 = arith.index_cast %1 : i32 to index
    %c0_0 = arith.constant 0 : index
    %c0_1 = arith.constant 0 : index
    %3 = vector.load %arg2[%c0, %2, %c0_0, %c0_1] : memref<1x20x20x4xf32, #tpu.memory_space<vmem>>, vector<1x12x20x4xf32>
    %4 = vector.shape_cast %3 : vector<1x12x20x4xf32> to vector<12x20x4xf32>
    %cst = arith.constant 0.000000e+00 : f32
    %5 = vector.broadcast %cst : f32 to vector<12x20x4xf32>
    %6 = arith.maximumf %4, %5 : vector<12x20x4xf32>
    %7 = vector.extract_strided_slice %6 {offsets = [0, 0, 0], sizes = [8, 16, 4], strides = [1, 1, 1]} : vector<12x20x4xf32> to vector<8x16x4xf32>
    %8 = vector.shape_cast %7 : vector<8x16x4xf32> to vector<128x4xf32>
    %c0_2 = arith.constant 0 : index
    %c0_3 = arith.constant 0 : index
    %9 = vector.load %arg6[%c0_2, %c0_3] : memref<128x36xf32, #tpu.memory_space<vmem>>, vector<128x4xf32>
    tpu.vector_store %arg6[%c0_2, %c0_3], %8 {strides = array<i32>} : memref<128x36xf32, #tpu.memory_space<vmem>>, vector<128x4xf32>,
    %10 = vector.extract_strided_slice %6 {offsets = [0, 2, 0], sizes = [8, 16, 4], strides = [1, 1, 1]} : vector<12x20x4xf32> to vector<8x16x4xf32>
    %11 = vector.shape_cast %10 : vector<8x16x4xf32> to vector<128x4xf32>
    %c0_4 = arith.constant 0 : index
    %c4 = arith.constant 4 : index
    %12 = vector.load %arg6[%c0_4, %c4] : memref<128x36xf32, #tpu.memory_space<vmem>>, vector<128x4xf32>
    tpu.vector_store %arg6[%c0_4, %c4], %11 {strides = array<i32>} : memref<128x36xf32, #tpu.memory_space<vmem>>, vector<128x4xf32>,
    %13 = vector.extract_strided_slice %6 {offsets = [0, 4, 0], sizes = [8, 16, 4], strides = [1, 1, 1]} : vector<12x20x4xf32> to vector<8x16x4xf32>
    %14 = vector.shape_cast %13 : vector<8x16x4xf32> to vector<128x4xf32>
    %c0_5 = arith.constant 0 : index
    %c8 = arith.constant 8 : index
    %15 = vector.load %arg6[%c0_5, %c8] : memref<128x36xf32, #tpu.memory_space<vmem>>, vector<128x4xf32>
    tpu.vector_store %arg6[%c0_5, %c8], %14 {strides = array<i32>} : memref<128x36xf32, #tpu.memory_space<vmem>>, vector<128x4xf32>,
    %16 = vector.extract_strided_slice %6 {offsets = [2, 0, 0], sizes = [8, 16, 4], strides = [1, 1, 1]} : vector<12x20x4xf32> to vector<8x16x4xf32>
    %17 = vector.shape_cast %16 : vector<8x16x4xf32> to vector<128x4xf32>
    %c0_6 = arith.constant 0 : index
    %c12 = arith.constant 12 : index
    %18 = vector.load %arg6[%c0_6, %c12] : memref<128x36xf32, #tpu.memory_space<vmem>>, vector<128x4xf32>
    tpu.vector_store %arg6[%c0_6, %c12], %17 {strides = array<i32>} : memref<128x36xf32, #tpu.memory_space<vmem>>, vector<128x4xf32>,
    %19 = vector.extract_strided_slice %6 {offsets = [2, 2, 0], sizes = [8, 16, 4], strides = [1, 1, 1]} : vector<12x20x4xf32> to vector<8x16x4xf32>
    %20 = vector.shape_cast %19 : vector<8x16x4xf32> to vector<128x4xf32>
    %c0_7 = arith.constant 0 : index
    %c16 = arith.constant 16 : index
    %21 = vector.load %arg6[%c0_7, %c16] : memref<128x36xf32, #tpu.memory_space<vmem>>, vector<128x4xf32>
    tpu.vector_store %arg6[%c0_7, %c16], %20 {strides = array<i32>} : memref<128x36xf32, #tpu.memory_space<vmem>>, vector<128x4xf32>,
    %22 = vector.extract_strided_slice %6 {offsets = [2, 4, 0], sizes = [8, 16, 4], strides = [1, 1, 1]} : vector<12x20x4xf32> to vector<8x16x4xf32>
    %23 = vector.shape_cast %22 : vector<8x16x4xf32> to vector<128x4xf32>
    %c0_8 = arith.constant 0 : index
    %c20 = arith.constant 20 : index
    %24 = vector.load %arg6[%c0_8, %c20] : memref<128x36xf32, #tpu.memory_space<vmem>>, vector<128x4xf32>
    tpu.vector_store %arg6[%c0_8, %c20], %23 {strides = array<i32>} : memref<128x36xf32, #tpu.memory_space<vmem>>, vector<128x4xf32>,
    %25 = vector.extract_strided_slice %6 {offsets = [4, 0, 0], sizes = [8, 16, 4], strides = [1, 1, 1]} : vector<12x20x4xf32> to vector<8x16x4xf32>
    %26 = vector.shape_cast %25 : vector<8x16x4xf32> to vector<128x4xf32>
    %c0_9 = arith.constant 0 : index
    %c24 = arith.constant 24 : index
    %27 = vector.load %arg6[%c0_9, %c24] : memref<128x36xf32, #tpu.memory_space<vmem>>, vector<128x4xf32>
    tpu.vector_store %arg6[%c0_9, %c24], %26 {strides = array<i32>} : memref<128x36xf32, #tpu.memory_space<vmem>>, vector<128x4xf32>,
    %28 = vector.extract_strided_slice %6 {offsets = [4, 2, 0], sizes = [8, 16, 4], strides = [1, 1, 1]} : vector<12x20x4xf32> to vector<8x16x4xf32>
    %29 = vector.shape_cast %28 : vector<8x16x4xf32> to vector<128x4xf32>
    %c0_10 = arith.constant 0 : index
    %c28 = arith.constant 28 : index
    %30 = vector.load %arg6[%c0_10, %c28] : memref<128x36xf32, #tpu.memory_space<vmem>>, vector<128x4xf32>
    tpu.vector_store %arg6[%c0_10, %c28], %29 {strides = array<i32>} : memref<128x36xf32, #tpu.memory_space<vmem>>, vector<128x4xf32>,
    %31 = vector.extract_strided_slice %6 {offsets = [4, 4, 0], sizes = [8, 16, 4], strides = [1, 1, 1]} : vector<12x20x4xf32> to vector<8x16x4xf32>
    %32 = vector.shape_cast %31 : vector<8x16x4xf32> to vector<128x4xf32>
    %c0_11 = arith.constant 0 : index
    %c32 = arith.constant 32 : index
    %33 = vector.load %arg6[%c0_11, %c32] : memref<128x36xf32, #tpu.memory_space<vmem>>, vector<128x4xf32>
    tpu.vector_store %arg6[%c0_11, %c32], %32 {strides = array<i32>} : memref<128x36xf32, #tpu.memory_space<vmem>>, vector<128x4xf32>,
    %c0_12 = arith.constant 0 : index
    %c0_13 = arith.constant 0 : index
    %34 = vector.load %arg6[%c0_12, %c0_13] : memref<128x36xf32, #tpu.memory_space<vmem>>, vector<128x36xf32>
    %c0_14 = arith.constant 0 : index
    %c0_15 = arith.constant 0 : index
    %35 = vector.load %arg3[%c0_14, %c0_15] : memref<36x8xf32, #tpu.memory_space<vmem>>, vector<36x8xf32>
    %cst_16 = arith.constant dense<0.000000e+00> : vector<128x8xf32>
    %36 = tpu.matmul %34, %35, %cst_16 {dimension_numbers = #tpu.dot_dimension_numbers<[1], [0], [0], [1], [0, 0, 1, 1], [], []>} : vector<128x36xf32>, vector<36x8xf32>, vector<128x8xf32> -> vector<128x8xf32>
    %c0_17 = arith.constant 0 : index
    %c0_18 = arith.constant 0 : index
    %37 = vector.load %arg4[%c0_17, %c0_18] : memref<1x8xf32, #tpu.memory_space<vmem>>, vector<1x8xf32>
    %38 = vector.broadcast %37 : vector<1x8xf32> to vector<128x8xf32>
    %39 = arith.addf %36, %38 : vector<128x8xf32>
    %40 = vector.shape_cast %39 : vector<128x8xf32> to vector<8x16x8xf32>
    %c0_19 = arith.constant 0 : index
    %c0_20 = arith.constant 0 : index
    %c0_21 = arith.constant 0 : index
    %c0_22 = arith.constant 0 : index
    %41 = vector.load %arg5[%c0_19, %c0_20, %c0_21, %c0_22] : memref<1x8x16x8xf32, #tpu.memory_space<vmem>>, vector<1x8x16x8xf32>
    %42 = vector.shape_cast %41 : vector<1x8x16x8xf32> to vector<8x16x8xf32>
    %43 = vector.shape_cast %40 : vector<8x16x8xf32> to vector<1x8x16x8xf32>
    tpu.vector_store %arg5[%c0_19, %c0_20, %c0_21, %c0_22], %43 {strides = array<i32>} : memref<1x8x16x8xf32, #tpu.memory_space<vmem>>, vector<1x8x16x8xf32>,
    return
  }
  func.func @transform_0(%arg0: i32, %arg1: i32) -> (i32, i32, i32, i32) {
    %c0_i32 = arith.constant 0 : i32
    %c0_i32_0 = arith.constant 0 : i32
    %c0_i32_1 = arith.constant 0 : i32
    %c0_i32_2 = arith.constant 0 : i32
    return %arg0, %c0_i32, %c0_i32_0, %c0_i32_1 : i32, i32, i32, i32
  }
  func.func @transform_1(%arg0: i32, %arg1: i32) -> (i32, i32) {
    %c0_i32 = arith.constant 0 : i32
    %c0_i32_0 = arith.constant 0 : i32
    %c0_i32_1 = arith.constant 0 : i32
    return %c0_i32, %c0_i32_0 : i32, i32
  }
  func.func @transform_2(%arg0: i32, %arg1: i32) -> (i32, i32) {
    %c0_i32 = arith.constant 0 : i32
    %c0_i32_0 = arith.constant 0 : i32
    %c0_i32_1 = arith.constant 0 : i32
    return %c0_i32, %c0_i32_0 : i32, i32
  }
  func.func @transform_3(%arg0: i32, %arg1: i32) -> (i32, i32, i32, i32) {
    %c0_i32 = arith.constant 0 : i32
    %c0_i32_0 = arith.constant 0 : i32
    %c0_i32_1 = arith.constant 0 : i32
    return %arg0, %arg1, %c0_i32, %c0_i32_0 : i32, i32, i32, i32
  }
}

</mosaic_0001>

<llo_original>
// kernel: dil_conv_forward.1
$region0: #{dil_conv_forward.1}
  #allocation0 [shape = 'u32[]', space=smem, size = 0x4, offset = 0x4, fixed_abs, tag = 'smem constant byte address 0x4 - core index']
  #allocation1 [shape = 'u32[144,128]{1,0:T(1,128)}', space=vmem, size = 0x12000, scoped, tag = 'internal scratch']
  #allocation2 [shape = 'f32[128,36]{1,0:T(8,128)}', space=vmem, size = 0x10000, scoped, tag = 'scratch operand']
  %s0 = inlined_call_operand.vmem [shape: f32[2,20,20,4], index: 0, kind: input, shape index: {}]
  %s1 = inlined_call_operand.vmem [shape: f32[36,8], index: 1, kind: input, shape index: {}]
  %s2 = inlined_call_operand.vmem [shape: f32[1,8], index: 2, kind: input, shape index: {}]
  %s3 = inlined_call_operand.vmem [shape: f32[2,16,16,8], index: 3, kind: output, shape index: {}]
  %s4 = sld [smem:[#allocation0]]
  $region45: #{dil_conv_forward.1} parent=0
    _
  %s6 = ssub.s32 1, %s4
  %s7 = scalar_select 0, %s6, %s4
  loop: start=0, step=1, limit=6
  $region2: #{dil_conv_forward.1} parent=0 // loop_pre_header
    _
  $region3: #{dil_conv_forward.1} parent=0 // loop_header
    %s9 = sphi 0, %s13
    %p10 = scmp.ge.s32.totalorder %s9, 6
    %s16 = sphi 0, %s28
    %s17 = sphi 0, %s24
    %s18 = sphi 0, %s16
    %s19 = sphi 0, %s17
    %s20 = sphi 0, %s18
    %s21 = sphi 0, %s19
    %s31 = sphi 0, %s33
    %s34 = sphi 0, %s31
    %s35 = sphi 0, %s34
    %s51 = sphi 0, %s35
    %s55 = sphi 0, %s55
    %s57 = sphi 0, %s55
    %s58 = sphi 0, %s57
    %s72 = sphi 0, %s58
    %s76 = sphi 0, %s76
    %s78 = sphi 0, %s76
    %s79 = sphi 0, %s78
    %s93 = sphi 0, %s79
    %s101 = sphi 0, %s103
    %s104 = sphi 0, %s101
    %s105 = sphi 0, %s104
    %s121 = sphi 0, %s105
  $region4: #{dil_conv_forward.1} parent=0 // loop_header_branch
    %12 = sbr.rel (%p10) target = $region8
  $region5: #{dil_conv_forward.1} parent=0 // loop_body
    %s14 = ssub.s32 %s9, 1
    %s15 = ssub.s32 %s9, 2
    %s22 = sadd.s32 1, %s17
    %p23 = scmp.ge.s32.totalorder %s22, 2
    %s24 = scalar_select %p23, 0, %s22
    %s25 = sadd.s32 1, %s16
    %s26 = scalar_select %p23, %s25, %s16
    %p27 = scmp.ge.s32.totalorder %s26, 2
    %s28 = scalar_select %p27, 0, %s26
    %s29 = ssub.s32 %s16, %s28
    %p30 = scmp.eq.s32.totalorder %s29, 0
    %s32 = sadd.s32 %s31, 1
    %s33 = scalar_select %p30, %s31, %s32
    %p36 = pneg %p30
    %p37 = scmp.eq.s32.totalorder %s9, 3
    %p38 = por %p36, %p37
    %p39 = scmp.ne.s32.totalorder %s31, %s34
    %p40 = scmp.eq.s32.totalorder %s9, 0
    %p41 = por %p39, %p40
    %p42 = scmp.ne.s32.totalorder %s31, %s34
    %p43 = scmp.eq.s32.totalorder %s14, 3
    %p44 = por %p42, %p43
    %p45 = scmp.ne.s32.totalorder %s34, %s35
    %p46 = scmp.eq.s32.totalorder %s14, 0
    %p47 = por %p45, %p46
    %p48 = scmp.ne.s32.totalorder %s34, %s35
    %p49 = scmp.eq.s32.totalorder %s15, 3
    %p50 = por %p48, %p49
    %p52 = scmp.ne.s32.totalorder %s35, %s51
    %p53 = scmp.eq.s32.totalorder %s15, 0
    %p54 = por %p52, %p53
    %s56 = sadd.s32 %s55, 1
    %p59 = scmp.eq.s32.totalorder %s9, 3
    %p60 = scmp.ne.s32.totalorder %s55, %s57
    %p61 = scmp.eq.s32.totalorder %s9, 0
    %p62 = por %p60, %p61
    %p63 = scmp.ne.s32.totalorder %s55, %s57
    %p64 = scmp.eq.s32.totalorder %s14, 3
    %p65 = por %p63, %p64
    %p66 = scmp.ne.s32.totalorder %s57, %s58
    %p67 = scmp.eq.s32.totalorder %s14, 0
    %p68 = por %p66, %p67
    %p69 = scmp.ne.s32.totalorder %s57, %s58
    %p70 = scmp.eq.s32.totalorder %s15, 3
    %p71 = por %p69, %p70
    %p73 = scmp.ne.s32.totalorder %s58, %s72
    %p74 = scmp.eq.s32.totalorder %s15, 0
    %p75 = por %p73, %p74
    %s77 = sadd.s32 %s76, 1
    %p80 = scmp.eq.s32.totalorder %s9, 3
    %p81 = scmp.ne.s32.totalorder %s76, %s78
    %p82 = scmp.eq.s32.totalorder %s9, 0
    %p83 = por %p81, %p82
    %p84 = scmp.ne.s32.totalorder %s76, %s78
    %p85 = scmp.eq.s32.totalorder %s14, 3
    %p86 = por %p84, %p85
    %p87 = scmp.ne.s32.totalorder %s78, %s79
    %p88 = scmp.eq.s32.totalorder %s14, 0
    %p89 = por %p87, %p88
    %p90 = scmp.ne.s32.totalorder %s78, %s79
    %p91 = scmp.eq.s32.totalorder %s15, 3
    %p92 = por %p90, %p91
    %p94 = scmp.ne.s32.totalorder %s79, %s93
    %p95 = scmp.eq.s32.totalorder %s15, 0
    %p96 = por %p94, %p95
    %s97 = ssub.s32 %s16, %s28
    %s98 = ssub.s32 %s17, %s24
    %s99 = sor.u32 %s97, %s98
    %p100 = scmp.eq.s32.totalorder %s99, 0
    %s102 = sadd.s32 %s101, 1
    %s103 = scalar_select %p100, %s101, %s102
    %p106 = pneg %p100
    %p107 = scmp.eq.s32.totalorder %s9, 3
    %p108 = por %p106, %p107
    %p109 = scmp.ne.s32.totalorder %s101, %s104
    %p110 = scmp.eq.s32.totalorder %s9, 0
    %p111 = por %p109, %p110
    %p112 = scmp.ne.s32.totalorder %s101, %s104
    %p113 = scmp.eq.s32.totalorder %s14, 3
    %p114 = por %p112, %p113
    %p115 = scmp.ne.s32.totalorder %s104, %s105
    %p116 = scmp.eq.s32.totalorder %s14, 0
    %p117 = por %p115, %p116
    %p118 = scmp.ne.s32.totalorder %s104, %s105
    %p119 = scmp.eq.s32.totalorder %s15, 3
    %p120 = por %p118, %p119
    %p122 = scmp.ne.s32.totalorder %s105, %s121
    %p123 = scmp.eq.s32.totalorder %s15, 0
    %p124 = por %p122, %p123
    %p125 = scmp.le.s32.totalorder 1, %s9
    %p126 = scmp.lt.s32.totalorder %s9, 5
    %p127 = pnand %p125, %p126
    %p128 = pneg %p127
    // Predicated region
    $region9: #{dil_conv_forward.1} parent=5 // pred_check
      _
    $region10: #{dil_conv_forward.1} parent=5 // pred_check_branch
      %130 = sbr.rel (%p127) target = $region12
    $region11: #{dil_conv_forward.1} parent=5 // pred_region
      %s131 = ssub.s32 %s9, 1
      // Predicated region
      $region13: #{dil_conv_forward.1} parent=11 // pred_check
        %p132 = pneg %p68
      $region14: #{dil_conv_forward.1} parent=11 // pred_check_branch
        %134 = sbr.rel (%p132) target = $region16
      $region15: #{dil_conv_forward.1} parent=11 // pred_region
        _
      $region16: #{dil_conv_forward.1} parent=11 // pred_fallthru
        _
      // Predicated region
      $region17: #{dil_conv_forward.1} parent=11 // pred_check
        %p135 = pneg %p89
      $region18: #{dil_conv_forward.1} parent=11 // pred_check_branch
        %137 = sbr.rel (%p135) target = $region20
      $region19: #{dil_conv_forward.1} parent=11 // pred_region
        _
      $region20: #{dil_conv_forward.1} parent=11 // pred_fallthru
        _
    $region12: #{dil_conv_forward.1} parent=5 // pred_fallthru
      _
    %p138 = scmp.lt.s32.totalorder %s9, 4
    // Predicated region
    $region21: #{dil_conv_forward.1} parent=5 // pred_check
      %p139 = pneg %p138
    $region22: #{dil_conv_forward.1} parent=5 // pred_check_branch
      %141 = sbr.rel (%p139) target = $region24
    $region23: #{dil_conv_forward.1} parent=5 // pred_region
      // Predicated region
      $region25: #{dil_conv_forward.1} parent=23 // pred_check
        %p142 = pneg %p41
      $region26: #{dil_conv_forward.1} parent=23 // pred_check_branch
        %144 = sbr.rel (%p142) target = $region28
      $region27: #{dil_conv_forward.1} parent=23 // pred_region
        %p145 = scmp.lt.s32.totalorder %s16, 1
        %s146 = scalar_select %p145, %s16, 1
        %s147 = smul.addr %s146, 60
        %s148 = smul.addr %s147, 8
        %s149 = scalar_lea.vmem %s0, %s148
      $region28: #{dil_conv_forward.1} parent=23 // pred_fallthru
        _
    $region24: #{dil_conv_forward.1} parent=5 // pred_fallthru
      _
    %p150 = scmp.le.s32.totalorder 1, %s9
    %p151 = scmp.lt.s32.totalorder %s9, 5
    %p152 = pnand %p150, %p151
    %p153 = pneg %p152
    // Predicated region
    $region29: #{dil_conv_forward.1} parent=5 // pred_check
      _
    $region30: #{dil_conv_forward.1} parent=5 // pred_check_branch
      %155 = sbr.rel (%p152) target = $region32
    $region31: #{dil_conv_forward.1} parent=5 // pred_region
      %s156 = ssub.s32 %s9, 1
      %p157 = scmp.lt.s32.totalorder %s18, 1
      %s158 = scalar_select %p157, %s18, 1
      %s159 = smul.addr %s158, 60
      %s160 = smul.addr %s159, 8
      %s161 = scalar_lea.vmem %s0, %s160
      %p162 = pneg %p47
      %p163 = pneg %p44
      %p164 = pneg %p68
      %p165 = pneg %p65
      %p166 = pneg %p89
      %p167 = pneg %p86
      %p168 = pneg %p117
      %p169 = pneg %p114
      %s170 = smul.u32 8, %s19
      %p171 = scmp.lt.s32.totalorder %s18, 1
      %s172 = scalar_select %p171, %s18, 1
      %p173 = scmp.lt.s32.totalorder %s170, 15
      %s174 = scalar_select %p173, %s170, 15
      %s175 = smul.addr %s174, 2
      %s176 = smul.addr %s172, 32
      %s177 = sadd.s32 %s175, %s176
      %s178 = smul.addr %s177, 8
      %s179 = scalar_lea.vmem %s3, %s178
      %p180 = scmp.lt.s32.totalorder %s18, 1
      %s181 = scalar_select %p180, %s18, 1
      %s182 = smul.addr %s181, 60
      %s183 = smul.addr %s182, 8
      %s184 = scalar_lea.vmem %s0, %s183
      %s185 = smul.u32 8, %s19
      %p186 = scmp.lt.s32.totalorder %s18, 1
      %s187 = scalar_select %p186, %s18, 1
      %p188 = scmp.lt.s32.totalorder %s185, 15
      %s189 = scalar_select %p188, %s185, 15
      %s190 = smul.addr %s189, 2
      %s191 = smul.addr %s187, 32
      %s192 = sadd.s32 %s190, %s191
      %s193 = smul.addr %s192, 8
      %s194 = scalar_lea.vmem %s3, %s193
      %s195 = smul.u32 8, %s19
      %s196 = smul.u32 %s19, 8
      %s197 = smul.u32 %s196, 24
      %s198 = scalar_lea.vmem %s184, %s197
      %v199 = vld [vmem:[%s198] sm:$0xff]
      %v200 = vld [vmem:[%s198 + $0x8] sm:$0xff]
      %v201 = vld [vmem:[%s198 + $0x10] sm:$0xf]
      %v202 = vld [vmem:[%s198 + $0x18] sm:$0xff]
      %v203 = vld [vmem:[%s198 + $0x20] sm:$0xff]
      %v204 = vld [vmem:[%s198 + $0x28] sm:$0xf]
      %v205 = vld [vmem:[%s198 + $0x30] sm:$0xff]
      %v206 = vld [vmem:[%s198 + $0x38] sm:$0xff]
      %v207 = vld [vmem:[%s198 + $0x40] sm:$0xf]
      %v208 = vld [vmem:[%s198 + $0x48] sm:$0xff]
      %v209 = vld [vmem:[%s198 + $0x50] sm:$0xff]
      %v210 = vld [vmem:[%s198 + $0x58] sm:$0xf]
      %v211 = vld [vmem:[%s198 + $0x60] sm:$0xff]
      %v212 = vld [vmem:[%s198 + $0x68] sm:$0xff]
      %v213 = vld [vmem:[%s198 + $0x70] sm:$0xf]
      %v214 = vld [vmem:[%s198 + $0x78] sm:$0xff]
      %v215 = vld [vmem:[%s198 + $0x80] sm:$0xff]
      %v216 = vld [vmem:[%s198 + $0x88] sm:$0xf]
      %v217 = vld [vmem:[%s198 + $0x90] sm:$0xff]
      %v218 = vld [vmem:[%s198 + $0x98] sm:$0xff]
      %v219 = vld [vmem:[%s198 + $0xa0] sm:$0xf]
      %v220 = vld [vmem:[%s198 + $0xa8] sm:$0xff]
      %v221 = vld [vmem:[%s198 + $0xb0] sm:$0xff]
      %v222 = vld [vmem:[%s198 + $0xb8] sm:$0xf]
      %v223 = vld [vmem:[%s198 + $0xc0] sm:$0xff]
      %v224 = vld [vmem:[%s198 + $0xc8] sm:$0xff]
      %v225 = vld [vmem:[%s198 + $0xd0] sm:$0xf]
      %v226 = vld [vmem:[%s198 + $0xd8] sm:$0xff]
      %v227 = vld [vmem:[%s198 + $0xe0] sm:$0xff]
      %v228 = vld [vmem:[%s198 + $0xe8] sm:$0xf]
      %v229 = vld [vmem:[%s198 + $0xf0] sm:$0xff]
      %v230 = vld [vmem:[%s198 + $0xf8] sm:$0xff]
      %v231 = vld [vmem:[%s198 + $0x100] sm:$0xf]
      %v232 = vld [vmem:[%s198 + $0x108] sm:$0xff]
      %v233 = vld [vmem:[%s198 + $0x110] sm:$0xff]
      %v234 = vld [vmem:[%s198 + $0x118] sm:$0xf]
      %v235 = vmax.f32 %v199, 0.0
      %v236 = vmax.f32 %v200, 0.0
      %v237 = vmax.f32 %v201, 0.0
      %v238 = vmax.f32 %v202, 0.0
      %v239 = vmax.f32 %v203, 0.0
      %v240 = vmax.f32 %v204, 0.0
      %v241 = vmax.f32 %v205, 0.0
      %v242 = vmax.f32 %v206, 0.0
      %v243 = vmax.f32 %v207, 0.0
      %v244 = vmax.f32 %v208, 0.0
      %v245 = vmax.f32 %v209, 0.0
      %v246 = vmax.f32 %v210, 0.0
      %v247 = vmax.f32 %v211, 0.0
      %v248 = vmax.f32 %v212, 0.0
      %v249 = vmax.f32 %v213, 0.0
      %v250 = vmax.f32 %v214, 0.0
      %v251 = vmax.f32 %v215, 0.0
      %v252 = vmax.f32 %v216, 0.0
      %v253 = vmax.f32 %v217, 0.0
      %v254 = vmax.f32 %v218, 0.0
      %v255 = vmax.f32 %v219, 0.0
      %v256 = vmax.f32 %v220, 0.0
      %v257 = vmax.f32 %v221, 0.0
      %v258 = vmax.f32 %v222, 0.0
      %v259 = vmax.f32 %v223, 0.0
      %v260 = vmax.f32 %v224, 0.0
      %v261 = vmax.f32 %v225, 0.0
      %v262 = vmax.f32 %v226, 0.0
      %v263 = vmax.f32 %v227, 0.0
      %v264 = vmax.f32 %v228, 0.0
      %v265 = vmax.f32 %v229, 0.0
      %v266 = vmax.f32 %v230, 0.0
      %v267 = vmax.f32 %v231, 0.0
      %v268 = vmax.f32 %v232, 0.0
      %v269 = vmax.f32 %v233, 0.0
      %v270 = vmax.f32 %v234, 0.0
      %vm271 = vcmask 31744
      %272 = vst.msk [vmem:[#allocation2] sm:$0xff] %vm271, %v235
      %273 = vst.msk [vmem:[#allocation2 + $0x8] sm:$0xff] %vm271, %v236
      %274 = vst.msk [vmem:[#allocation2 + $0x10] sm:$0xff] %vm271, %v238
      %275 = vst.msk [vmem:[#allocation2 + $0x18] sm:$0xff] %vm271, %v239
      %276 = vst.msk [vmem:[#allocation2 + $0x20] sm:$0xff] %vm271, %v241
      %277 = vst.msk [vmem:[#allocation2 + $0x28] sm:$0xff] %vm271, %v242
      %278 = vst.msk [vmem:[#allocation2 + $0x30] sm:$0xff] %vm271, %v244
      %279 = vst.msk [vmem:[#allocation2 + $0x38] sm:$0xff] %vm271, %v245
      %280 = vst.msk [vmem:[#allocation2 + $0x40] sm:$0xff] %vm271, %v247
      %281 = vst.msk [vmem:[#allocation2 + $0x48] sm:$0xff] %vm271, %v248
      %282 = vst.msk [vmem:[#allocation2 + $0x50] sm:$0xff] %vm271, %v250
      %283 = vst.msk [vmem:[#allocation2 + $0x58] sm:$0xff] %vm271, %v251
      %284 = vst.msk [vmem:[#allocation2 + $0x60] sm:$0xff] %vm271, %v253
      %285 = vst.msk [vmem:[#allocation2 + $0x68] sm:$0xff] %vm271, %v254
      %286 = vst.msk [vmem:[#allocation2 + $0x70] sm:$0xff] %vm271, %v256
      %287 = vst.msk [vmem:[#allocation2 + $0x78] sm:$0xff] %vm271, %v257
      %vm312 = vcmask 1045504
      %v313 = vrot.slane %v235, 2
      %v314 = vrot.slane %v236, 2
      %v315 = vsel %vm312, %v313, %v314
      %v316 = vrot.slane %v237, 2
      %v317 = vsel %vm312, %v314, %v316
      %v318 = vrot.slane %v238, 2
      %v319 = vrot.slane %v239, 2
      %v320 = vsel %vm312, %v318, %v319
      %v321 = vrot.slane %v240, 2
      %v322 = vsel %vm312, %v319, %v321
      %v323 = vrot.slane %v241, 2
      %v324 = vrot.slane %v242, 2
      %v325 = vsel %vm312, %v323, %v324
      %v326 = vrot.slane %v243, 2
      %v327 = vsel %vm312, %v324, %v326
      %v328 = vrot.slane %v244, 2
      %v329 = vrot.slane %v245, 2
      %v330 = vsel %vm312, %v328, %v329
      %v331 = vrot.slane %v246, 2
      %v332 = vsel %vm312, %v329, %v331
      %v333 = vrot.slane %v247, 2
      %v334 = vrot.slane %v248, 2
      %v335 = vsel %vm312, %v333, %v334
      %v336 = vrot.slane %v249, 2
      %v337 = vsel %vm312, %v334, %v336
      %v338 = vrot.slane %v250, 2
      %v339 = vrot.slane %v251, 2
      %v340 = vsel %vm312, %v338, %v339
      %v341 = vrot.slane %v252, 2
      %v342 = vsel %vm312, %v339, %v341
      %v343 = vrot.slane %v253, 2
      %v344 = vrot.slane %v254, 2
      %v345 = vsel %vm312, %v343, %v344
      %v346 = vrot.slane %v255, 2
      %v347 = vsel %vm312, %v344, %v346
      %v348 = vrot.slane %v256, 2
      %v349 = vrot.slane %v257, 2
      %v350 = vsel %vm312, %v348, %v349
      %v351 = vrot.slane %v258, 2
      %v352 = vsel %vm312, %v349, %v351
      %353 = vrot.lane.b32.xlu0 %v315, 4
      %v354 = vpop.permute.xlu0 %353
      %355 = vrot.lane.b32.xlu0 %v317, 4
      %v356 = vpop.permute.xlu0 %355
      %357 = vrot.lane.b32.xlu0 %v320, 4
      %v358 = vpop.permute.xlu0 %357
      %359 = vrot.lane.b32.xlu0 %v322, 4
      %v360 = vpop.permute.xlu0 %359
      %361 = vrot.lane.b32.xlu0 %v325, 4
      %v362 = vpop.permute.xlu0 %361
      %363 = vrot.lane.b32.xlu0 %v327, 4
      %v364 = vpop.permute.xlu0 %363
      %365 = vrot.lane.b32.xlu0 %v330, 4
      %v366 = vpop.permute.xlu0 %365
      %367 = vrot.lane.b32.xlu0 %v332, 4
      %v368 = vpop.permute.xlu0 %367
      %369 = vrot.lane.b32.xlu0 %v335, 4
      %v370 = vpop.permute.xlu0 %369
      %371 = vrot.lane.b32.xlu0 %v337, 4
      %v372 = vpop.permute.xlu0 %371
      %373 = vrot.lane.b32.xlu0 %v340, 4
      %v374 = vpop.permute.xlu0 %373
      %375 = vrot.lane.b32.xlu0 %v342, 4
      %v376 = vpop.permute.xlu0 %375
      %377 = vrot.lane.b32.xlu0 %v345, 4
      %v378 = vpop.permute.xlu0 %377
      %379 = vrot.lane.b32.xlu0 %v347, 4
      %v380 = vpop.permute.xlu0 %379
      %381 = vrot.lane.b32.xlu0 %v350, 4
      %v382 = vpop.permute.xlu0 %381
      %383 = vrot.lane.b32.xlu0 %v352, 4
      %v384 = vpop.permute.xlu0 %383
      %vm401 = vcmask 64544
      %402 = vst.msk [vmem:[#allocation2] sm:$0xff] %vm401, %v354
      %403 = vst.msk [vmem:[#allocation2 + $0x8] sm:$0xff] %vm401, %v356
      %404 = vst.msk [vmem:[#allocation2 + $0x10] sm:$0xff] %vm401, %v358
      %405 = vst.msk [vmem:[#allocation2 + $0x18] sm:$0xff] %vm401, %v360
      %406 = vst.msk [vmem:[#allocation2 + $0x20] sm:$0xff] %vm401, %v362
      %407 = vst.msk [vmem:[#allocation2 + $0x28] sm:$0xff] %vm401, %v364
      %408 = vst.msk [vmem:[#allocation2 + $0x30] sm:$0xff] %vm401, %v366
      %409 = vst.msk [vmem:[#allocation2 + $0x38] sm:$0xff] %vm401, %v368
      %410 = vst.msk [vmem:[#allocation2 + $0x40] sm:$0xff] %vm401, %v370
      %411 = vst.msk [vmem:[#allocation2 + $0x48] sm:$0xff] %vm401, %v372
      %412 = vst.msk [vmem:[#allocation2 + $0x50] sm:$0xff] %vm401, %v374
      %413 = vst.msk [vmem:[#allocation2 + $0x58] sm:$0xff] %vm401, %v376
      %414 = vst.msk [vmem:[#allocation2 + $0x60] sm:$0xff] %vm401, %v378
      %415 = vst.msk [vmem:[#allocation2 + $0x68] sm:$0xff] %vm401, %v380
      %416 = vst.msk [vmem:[#allocation2 + $0x70] sm:$0xff] %vm401, %v382
      %417 = vst.msk [vmem:[#allocation2 + $0x78] sm:$0xff] %vm401, %v384
      %vm418 = vcmask 1043456
      %v419 = vrot.slane %v235, 4
      %v420 = vrot.slane %v236, 4
      %v421 = vsel %vm418, %v419, %v420
      %v422 = vrot.slane %v237, 4
      %v423 = vsel %vm418, %v420, %v422
      %v424 = vrot.slane %v238, 4
      %v425 = vrot.slane %v239, 4
      %v426 = vsel %vm418, %v424, %v425
      %v427 = vrot.slane %v240, 4
      %v428 = vsel %vm418, %v425, %v427
      %v429 = vrot.slane %v241, 4
      %v430 = vrot.slane %v242, 4
      %v431 = vsel %vm418, %v429, %v430
      %v432 = vrot.slane %v243, 4
      %v433 = vsel %vm418, %v430, %v432
      %v434 = vrot.slane %v244, 4
      %v435 = vrot.slane %v245, 4
      %v436 = vsel %vm418, %v434, %v435
      %v437 = vrot.slane %v246, 4
      %v438 = vsel %vm418, %v435, %v437
      %v439 = vrot.slane %v247, 4
      %v440 = vrot.slane %v248, 4
      %v441 = vsel %vm418, %v439, %v440
      %v442 = vrot.slane %v249, 4
      %v443 = vsel %vm418, %v440, %v442
      %v444 = vrot.slane %v250, 4
      %v445 = vrot.slane %v251, 4
      %v446 = vsel %vm418, %v444, %v445
      %v447 = vrot.slane %v252, 4
      %v448 = vsel %vm418, %v445, %v447
      %v449 = vrot.slane %v253, 4
      %v450 = vrot.slane %v254, 4
      %v451 = vsel %vm418, %v449, %v450
      %v452 = vrot.slane %v255, 4
      %v453 = vsel %vm418, %v450, %v452
      %v454 = vrot.slane %v256, 4
      %v455 = vrot.slane %v257, 4
      %v456 = vsel %vm418, %v454, %v455
      %v457 = vrot.slane %v258, 4
      %v458 = vsel %vm418, %v455, %v457
      %459 = vrot.lane.b32.xlu0 %v421, 8
      %v460 = vpop.permute.xlu0 %459
      %461 = vrot.lane.b32.xlu0 %v423, 8
      %v462 = vpop.permute.xlu0 %461
      %463 = vrot.lane.b32.xlu0 %v426, 8
      %v464 = vpop.permute.xlu0 %463
      %465 = vrot.lane.b32.xlu0 %v428, 8
      %v466 = vpop.permute.xlu0 %465
      %467 = vrot.lane.b32.xlu0 %v431, 8
      %v468 = vpop.permute.xlu0 %467
      %469 = vrot.lane.b32.xlu0 %v433, 8
      %v470 = vpop.permute.xlu0 %469
      %471 = vrot.lane.b32.xlu0 %v436, 8
      %v472 = vpop.permute.xlu0 %471
      %473 = vrot.lane.b32.xlu0 %v438, 8
      %v474 = vpop.permute.xlu0 %473
      %475 = vrot.lane.b32.xlu0 %v441, 8
      %v476 = vpop.permute.xlu0 %475
      %477 = vrot.lane.b32.xlu0 %v443, 8
      %v478 = vpop.permute.xlu0 %477
      %479 = vrot.lane.b32.xlu0 %v446, 8
      %v480 = vpop.permute.xlu0 %479
      %481 = vrot.lane.b32.xlu0 %v448, 8
      %v482 = vpop.permute.xlu0 %481
      %483 = vrot.lane.b32.xlu0 %v451, 8
      %v484 = vpop.permute.xlu0 %483
      %485 = vrot.lane.b32.xlu0 %v453, 8
      %v486 = vpop.permute.xlu0 %485
      %487 = vrot.lane.b32.xlu0 %v456, 8
      %v488 = vpop.permute.xlu0 %487
      %489 = vrot.lane.b32.xlu0 %v458, 8
      %v490 = vpop.permute.xlu0 %489
      %vm507 = vcmask 97344
      %508 = vst.msk [vmem:[#allocation2] sm:$0xff] %vm507, %v460
      %509 = vst.msk [vmem:[#allocation2 + $0x8] sm:$0xff] %vm507, %v462
      %510 = vst.msk [vmem:[#allocation2 + $0x10] sm:$0xff] %vm507, %v464
      %511 = vst.msk [vmem:[#allocation2 + $0x18] sm:$0xff] %vm507, %v466
      %512 = vst.msk [vmem:[#allocation2 + $0x20] sm:$0xff] %vm507, %v468
      %513 = vst.msk [vmem:[#allocation2 + $0x28] sm:$0xff] %vm507, %v470
      %514 = vst.msk [vmem:[#allocation2 + $0x30] sm:$0xff] %vm507, %v472
      %515 = vst.msk [vmem:[#allocation2 + $0x38] sm:$0xff] %vm507, %v474
      %516 = vst.msk [vmem:[#allocation2 + $0x40] sm:$0xff] %vm507, %v476
      %517 = vst.msk [vmem:[#allocation2 + $0x48] sm:$0xff] %vm507, %v478
      %518 = vst.msk [vmem:[#allocation2 + $0x50] sm:$0xff] %vm507, %v480
      %519 = vst.msk [vmem:[#allocation2 + $0x58] sm:$0xff] %vm507, %v482
      %520 = vst.msk [vmem:[#allocation2 + $0x60] sm:$0xff] %vm507, %v484
      %521 = vst.msk [vmem:[#allocation2 + $0x68] sm:$0xff] %vm507, %v486
      %522 = vst.msk [vmem:[#allocation2 + $0x70] sm:$0xff] %vm507, %v488
      %523 = vst.msk [vmem:[#allocation2 + $0x78] sm:$0xff] %vm507, %v490
      %528 = vrot.lane.b32.xlu0 %v241, 12
      %v529 = vpop.permute.xlu0 %528
      %530 = vrot.lane.b32.xlu0 %v242, 12
      %v531 = vpop.permute.xlu0 %530
      %532 = vrot.lane.b32.xlu0 %v244, 12
      %v533 = vpop.permute.xlu0 %532
      %534 = vrot.lane.b32.xlu0 %v245, 12
      %v535 = vpop.permute.xlu0 %534
      %536 = vrot.lane.b32.xlu0 %v247, 12
      %v537 = vpop.permute.xlu0 %536
      %538 = vrot.lane.b32.xlu0 %v248, 12
      %v539 = vpop.permute.xlu0 %538
      %540 = vrot.lane.b32.xlu0 %v250, 12
      %v541 = vpop.permute.xlu0 %540
      %542 = vrot.lane.b32.xlu0 %v251, 12
      %v543 = vpop.permute.xlu0 %542
      %544 = vrot.lane.b32.xlu0 %v253, 12
      %v545 = vpop.permute.xlu0 %544
      %546 = vrot.lane.b32.xlu0 %v254, 12
      %v547 = vpop.permute.xlu0 %546
      %548 = vrot.lane.b32.xlu0 %v256, 12
      %v549 = vpop.permute.xlu0 %548
      %550 = vrot.lane.b32.xlu0 %v257, 12
      %v551 = vpop.permute.xlu0 %550
      %552 = vrot.lane.b32.xlu0 %v259, 12
      %v553 = vpop.permute.xlu0 %552
      %554 = vrot.lane.b32.xlu0 %v260, 12
      %v555 = vpop.permute.xlu0 %554
      %556 = vrot.lane.b32.xlu0 %v262, 12
      %v557 = vpop.permute.xlu0 %556
      %558 = vrot.lane.b32.xlu0 %v263, 12
      %v559 = vpop.permute.xlu0 %558
      %vm576 = vcmask 130144
      %577 = vst.msk [vmem:[#allocation2] sm:$0xff] %vm576, %v529
      %578 = vst.msk [vmem:[#allocation2 + $0x8] sm:$0xff] %vm576, %v531
      %579 = vst.msk [vmem:[#allocation2 + $0x10] sm:$0xff] %vm576, %v533
      %580 = vst.msk [vmem:[#allocation2 + $0x18] sm:$0xff] %vm576, %v535
      %581 = vst.msk [vmem:[#allocation2 + $0x20] sm:$0xff] %vm576, %v537
      %582 = vst.msk [vmem:[#allocation2 + $0x28] sm:$0xff] %vm576, %v539
      %583 = vst.msk [vmem:[#allocation2 + $0x30] sm:$0xff] %vm576, %v541
      %584 = vst.msk [vmem:[#allocation2 + $0x38] sm:$0xff] %vm576, %v543
      %585 = vst.msk [vmem:[#allocation2 + $0x40] sm:$0xff] %vm576, %v545
      %586 = vst.msk [vmem:[#allocation2 + $0x48] sm:$0xff] %vm576, %v547
      %587 = vst.msk [vmem:[#allocation2 + $0x50] sm:$0xff] %vm576, %v549
      %588 = vst.msk [vmem:[#allocation2 + $0x58] sm:$0xff] %vm576, %v551
      %589 = vst.msk [vmem:[#allocation2 + $0x60] sm:$0xff] %vm576, %v553
      %590 = vst.msk [vmem:[#allocation2 + $0x68] sm:$0xff] %vm576, %v555
      %591 = vst.msk [vmem:[#allocation2 + $0x70] sm:$0xff] %vm576, %v557
      %592 = vst.msk [vmem:[#allocation2 + $0x78] sm:$0xff] %vm576, %v559
      %v595 = vrot.slane %v259, 2
      %v596 = vrot.slane %v260, 2
      %v597 = vsel %vm312, %v595, %v596
      %v598 = vrot.slane %v261, 2
      %v599 = vsel %vm312, %v596, %v598
      %v600 = vrot.slane %v262, 2
      %v601 = vrot.slane %v263, 2
      %v602 = vsel %vm312, %v600, %v601
      %v603 = vrot.slane %v264, 2
      %v604 = vsel %vm312, %v601, %v603
      %605 = vrot.lane.b32.xlu0 %v325, 16
      %v606 = vpop.permute.xlu0 %605
      %607 = vrot.lane.b32.xlu0 %v327, 16
      %v608 = vpop.permute.xlu0 %607
      %609 = vrot.lane.b32.xlu0 %v330, 16
      %v610 = vpop.permute.xlu0 %609
      %611 = vrot.lane.b32.xlu0 %v332, 16
      %v612 = vpop.permute.xlu0 %611
      %613 = vrot.lane.b32.xlu0 %v335, 16
      %v614 = vpop.permute.xlu0 %613
      %615 = vrot.lane.b32.xlu0 %v337, 16
      %v616 = vpop.permute.xlu0 %615
      %617 = vrot.lane.b32.xlu0 %v340, 16
      %v618 = vpop.permute.xlu0 %617
      %619 = vrot.lane.b32.xlu0 %v342, 16
      %v620 = vpop.permute.xlu0 %619
      %621 = vrot.lane.b32.xlu0 %v345, 16
      %v622 = vpop.permute.xlu0 %621
      %623 = vrot.lane.b32.xlu0 %v347, 16
      %v624 = vpop.permute.xlu0 %623
      %625 = vrot.lane.b32.xlu0 %v350, 16
      %v626 = vpop.permute.xlu0 %625
      %627 = vrot.lane.b32.xlu0 %v352, 16
      %v628 = vpop.permute.xlu0 %627
      %629 = vrot.lane.b32.xlu0 %v597, 16
      %v630 = vpop.permute.xlu0 %629
      %631 = vrot.lane.b32.xlu0 %v599, 16
      %v632 = vpop.permute.xlu0 %631
      %633 = vrot.lane.b32.xlu0 %v602, 16
      %v634 = vpop.permute.xlu0 %633
      %635 = vrot.lane.b32.xlu0 %v604, 16
      %v636 = vpop.permute.xlu0 %635
      %vm653 = vcmask 162944
      %654 = vst.msk [vmem:[#allocation2] sm:$0xff] %vm653, %v606
      %655 = vst.msk [vmem:[#allocation2 + $0x8] sm:$0xff] %vm653, %v608
      %656 = vst.msk [vmem:[#allocation2 + $0x10] sm:$0xff] %vm653, %v610
      %657 = vst.msk [vmem:[#allocation2 + $0x18] sm:$0xff] %vm653, %v612
      %658 = vst.msk [vmem:[#allocation2 + $0x20] sm:$0xff] %vm653, %v614
      %659 = vst.msk [vmem:[#allocation2 + $0x28] sm:$0xff] %vm653, %v616
      %660 = vst.msk [vmem:[#allocation2 + $0x30] sm:$0xff] %vm653, %v618
      %661 = vst.msk [vmem:[#allocation2 + $0x38] sm:$0xff] %vm653, %v620
      %662 = vst.msk [vmem:[#allocation2 + $0x40] sm:$0xff] %vm653, %v622
      %663 = vst.msk [vmem:[#allocation2 + $0x48] sm:$0xff] %vm653, %v624
      %664 = vst.msk [vmem:[#allocation2 + $0x50] sm:$0xff] %vm653, %v626
      %665 = vst.msk [vmem:[#allocation2 + $0x58] sm:$0xff] %vm653, %v628
      %666 = vst.msk [vmem:[#allocation2 + $0x60] sm:$0xff] %vm653, %v630
      %667 = vst.msk [vmem:[#allocation2 + $0x68] sm:$0xff] %vm653, %v632
      %668 = vst.msk [vmem:[#allocation2 + $0x70] sm:$0xff] %vm653, %v634
      %669 = vst.msk [vmem:[#allocation2 + $0x78] sm:$0xff] %vm653, %v636
      %v670 = vrot.slane %v259, 4
      %v671 = vrot.slane %v260, 4
      %v672 = vsel %vm418, %v670, %v671
      %v673 = vrot.slane %v261, 4
      %v674 = vsel %vm418, %v671, %v673
      %v675 = vrot.slane %v262, 4
      %v676 = vrot.slane %v263, 4
      %v677 = vsel %vm418, %v675, %v676
      %v678 = vrot.slane %v264, 4
      %v679 = vsel %vm418, %v676, %v678
      %680 = vrot.lane.b32.xlu0 %v431, 20
      %v681 = vpop.permute.xlu0 %680
      %682 = vrot.lane.b32.xlu0 %v433, 20
      %v683 = vpop.permute.xlu0 %682
      %684 = vrot.lane.b32.xlu0 %v436, 20
      %v685 = vpop.permute.xlu0 %684
      %686 = vrot.lane.b32.xlu0 %v438, 20
      %v687 = vpop.permute.xlu0 %686
      %688 = vrot.lane.b32.xlu0 %v441, 20
      %v689 = vpop.permute.xlu0 %688
      %690 = vrot.lane.b32.xlu0 %v443, 20
      %v691 = vpop.permute.xlu0 %690
      %692 = vrot.lane.b32.xlu0 %v446, 20
      %v693 = vpop.permute.xlu0 %692
      %694 = vrot.lane.b32.xlu0 %v448, 20
      %v695 = vpop.permute.xlu0 %694
      %696 = vrot.lane.b32.xlu0 %v451, 20
      %v697 = vpop.permute.xlu0 %696
      %698 = vrot.lane.b32.xlu0 %v453, 20
      %v699 = vpop.permute.xlu0 %698
      %700 = vrot.lane.b32.xlu0 %v456, 20
      %v701 = vpop.permute.xlu0 %700
      %702 = vrot.lane.b32.xlu0 %v458, 20
      %v703 = vpop.permute.xlu0 %702
      %704 = vrot.lane.b32.xlu0 %v672, 20
      %v705 = vpop.permute.xlu0 %704
      %706 = vrot.lane.b32.xlu0 %v674, 20
      %v707 = vpop.permute.xlu0 %706
      %708 = vrot.lane.b32.xlu0 %v677, 20
      %v709 = vpop.permute.xlu0 %708
      %710 = vrot.lane.b32.xlu0 %v679, 20
      %v711 = vpop.permute.xlu0 %710
      %vm728 = vcmask 195744
      %729 = vst.msk [vmem:[#allocation2] sm:$0xff] %vm728, %v681
      %730 = vst.msk [vmem:[#allocation2 + $0x8] sm:$0xff] %vm728, %v683
      %731 = vst.msk [vmem:[#allocation2 + $0x10] sm:$0xff] %vm728, %v685
      %732 = vst.msk [vmem:[#allocation2 + $0x18] sm:$0xff] %vm728, %v687
      %733 = vst.msk [vmem:[#allocation2 + $0x20] sm:$0xff] %vm728, %v689
      %734 = vst.msk [vmem:[#allocation2 + $0x28] sm:$0xff] %vm728, %v691
      %735 = vst.msk [vmem:[#allocation2 + $0x30] sm:$0xff] %vm728, %v693
      %736 = vst.msk [vmem:[#allocation2 + $0x38] sm:$0xff] %vm728, %v695
      %737 = vst.msk [vmem:[#allocation2 + $0x40] sm:$0xff] %vm728, %v697
      %738 = vst.msk [vmem:[#allocation2 + $0x48] sm:$0xff] %vm728, %v699
      %739 = vst.msk [vmem:[#allocation2 + $0x50] sm:$0xff] %vm728, %v701
      %740 = vst.msk [vmem:[#allocation2 + $0x58] sm:$0xff] %vm728, %v703
      %741 = vst.msk [vmem:[#allocation2 + $0x60] sm:$0xff] %vm728, %v705
      %742 = vst.msk [vmem:[#allocation2 + $0x68] sm:$0xff] %vm728, %v707
      %743 = vst.msk [vmem:[#allocation2 + $0x70] sm:$0xff] %vm728, %v709
      %744 = vst.msk [vmem:[#allocation2 + $0x78] sm:$0xff] %vm728, %v711
      %749 = vrot.lane.b32.xlu0 %v247, 24
      %v750 = vpop.permute.xlu0 %749
      %751 = vrot.lane.b32.xlu0 %v248, 24
      %v752 = vpop.permute.xlu0 %751
      %753 = vrot.lane.b32.xlu0 %v250, 24
      %v754 = vpop.permute.xlu0 %753
      %755 = vrot.lane.b32.xlu0 %v251, 24
      %v756 = vpop.permute.xlu0 %755
      %757 = vrot.lane.b32.xlu0 %v253, 24
      %v758 = vpop.permute.xlu0 %757
      %759 = vrot.lane.b32.xlu0 %v254, 24
      %v760 = vpop.permute.xlu0 %759
      %761 = vrot.lane.b32.xlu0 %v256, 24
      %v762 = vpop.permute.xlu0 %761
      %763 = vrot.lane.b32.xlu0 %v257, 24
      %v764 = vpop.permute.xlu0 %763
      %765 = vrot.lane.b32.xlu0 %v259, 24
      %v766 = vpop.permute.xlu0 %765
      %767 = vrot.lane.b32.xlu0 %v260, 24
      %v768 = vpop.permute.xlu0 %767
      %769 = vrot.lane.b32.xlu0 %v262, 24
      %v770 = vpop.permute.xlu0 %769
      %771 = vrot.lane.b32.xlu0 %v263, 24
      %v772 = vpop.permute.xlu0 %771
      %773 = vrot.lane.b32.xlu0 %v265, 24
      %v774 = vpop.permute.xlu0 %773
      %775 = vrot.lane.b32.xlu0 %v266, 24
      %v776 = vpop.permute.xlu0 %775
      %777 = vrot.lane.b32.xlu0 %v268, 24
      %v778 = vpop.permute.xlu0 %777
      %779 = vrot.lane.b32.xlu0 %v269, 24
      %v780 = vpop.permute.xlu0 %779
      %vm797 = vcmask 228544
      %798 = vst.msk [vmem:[#allocation2] sm:$0xff] %vm797, %v750
      %799 = vst.msk [vmem:[#allocation2 + $0x8] sm:$0xff] %vm797, %v752
      %800 = vst.msk [vmem:[#allocation2 + $0x10] sm:$0xff] %vm797, %v754
      %801 = vst.msk [vmem:[#allocation2 + $0x18] sm:$0xff] %vm797, %v756
      %802 = vst.msk [vmem:[#allocation2 + $0x20] sm:$0xff] %vm797, %v758
      %803 = vst.msk [vmem:[#allocation2 + $0x28] sm:$0xff] %vm797, %v760
      %804 = vst.msk [vmem:[#allocation2 + $0x30] sm:$0xff] %vm797, %v762
      %805 = vst.msk [vmem:[#allocation2 + $0x38] sm:$0xff] %vm797, %v764
      %806 = vst.msk [vmem:[#allocation2 + $0x40] sm:$0xff] %vm797, %v766
      %807 = vst.msk [vmem:[#allocation2 + $0x48] sm:$0xff] %vm797, %v768
      %808 = vst.msk [vmem:[#allocation2 + $0x50] sm:$0xff] %vm797, %v770
      %809 = vst.msk [vmem:[#allocation2 + $0x58] sm:$0xff] %vm797, %v772
      %810 = vst.msk [vmem:[#allocation2 + $0x60] sm:$0xff] %vm797, %v774
      %811 = vst.msk [vmem:[#allocation2 + $0x68] sm:$0xff] %vm797, %v776
      %812 = vst.msk [vmem:[#allocation2 + $0x70] sm:$0xff] %vm797, %v778
      %813 = vst.msk [vmem:[#allocation2 + $0x78] sm:$0xff] %vm797, %v780
      %v816 = vrot.slane %v265, 2
      %v817 = vrot.slane %v266, 2
      %v818 = vsel %vm312, %v816, %v817
      %v819 = vrot.slane %v267, 2
      %v820 = vsel %vm312, %v817, %v819
      %v821 = vrot.slane %v268, 2
      %v822 = vrot.slane %v269, 2
      %v823 = vsel %vm312, %v821, %v822
      %v824 = vrot.slane %v270, 2
      %v825 = vsel %vm312, %v822, %v824
      %826 = vrot.lane.b32.xlu0 %v335, 28
      %v827 = vpop.permute.xlu0 %826
      %828 = vrot.lane.b32.xlu0 %v337, 28
      %v829 = vpop.permute.xlu0 %828
      %830 = vrot.lane.b32.xlu0 %v340, 28
      %v831 = vpop.permute.xlu0 %830
      %832 = vrot.lane.b32.xlu0 %v342, 28
      %v833 = vpop.permute.xlu0 %832
      %834 = vrot.lane.b32.xlu0 %v345, 28
      %v835 = vpop.permute.xlu0 %834
      %836 = vrot.lane.b32.xlu0 %v347, 28
      %v837 = vpop.permute.xlu0 %836
      %838 = vrot.lane.b32.xlu0 %v350, 28
      %v839 = vpop.permute.xlu0 %838
      %840 = vrot.lane.b32.xlu0 %v352, 28
      %v841 = vpop.permute.xlu0 %840
      %842 = vrot.lane.b32.xlu0 %v597, 28
      %v843 = vpop.permute.xlu0 %842
      %844 = vrot.lane.b32.xlu0 %v599, 28
      %v845 = vpop.permute.xlu0 %844
      %846 = vrot.lane.b32.xlu0 %v602, 28
      %v847 = vpop.permute.xlu0 %846
      %848 = vrot.lane.b32.xlu0 %v604, 28
      %v849 = vpop.permute.xlu0 %848
      %850 = vrot.lane.b32.xlu0 %v818, 28
      %v851 = vpop.permute.xlu0 %850
      %852 = vrot.lane.b32.xlu0 %v820, 28
      %v853 = vpop.permute.xlu0 %852
      %854 = vrot.lane.b32.xlu0 %v823, 28
      %v855 = vpop.permute.xlu0 %854
      %856 = vrot.lane.b32.xlu0 %v825, 28
      %v857 = vpop.permute.xlu0 %856
      %vm874 = vcmask 261344
      %875 = vst.msk [vmem:[#allocation2] sm:$0xff] %vm874, %v827
      %876 = vst.msk [vmem:[#allocation2 + $0x8] sm:$0xff] %vm874, %v829
      %877 = vst.msk [vmem:[#allocation2 + $0x10] sm:$0xff] %vm874, %v831
      %878 = vst.msk [vmem:[#allocation2 + $0x18] sm:$0xff] %vm874, %v833
      %879 = vst.msk [vmem:[#allocation2 + $0x20] sm:$0xff] %vm874, %v835
      %880 = vst.msk [vmem:[#allocation2 + $0x28] sm:$0xff] %vm874, %v837
      %881 = vst.msk [vmem:[#allocation2 + $0x30] sm:$0xff] %vm874, %v839
      %882 = vst.msk [vmem:[#allocation2 + $0x38] sm:$0xff] %vm874, %v841
      %883 = vst.msk [vmem:[#allocation2 + $0x40] sm:$0xff] %vm874, %v843
      %884 = vst.msk [vmem:[#allocation2 + $0x48] sm:$0xff] %vm874, %v845
      %885 = vst.msk [vmem:[#allocation2 + $0x50] sm:$0xff] %vm874, %v847
      %886 = vst.msk [vmem:[#allocation2 + $0x58] sm:$0xff] %vm874, %v849
      %887 = vst.msk [vmem:[#allocation2 + $0x60] sm:$0xff] %vm874, %v851
      %888 = vst.msk [vmem:[#allocation2 + $0x68] sm:$0xff] %vm874, %v853
      %889 = vst.msk [vmem:[#allocation2 + $0x70] sm:$0xff] %vm874, %v855
      %890 = vst.msk [vmem:[#allocation2 + $0x78] sm:$0xff] %vm874, %v857
      %v891 = vrot.slane %v265, 4
      %v892 = vrot.slane %v266, 4
      %v893 = vsel %vm418, %v891, %v892
      %v894 = vrot.slane %v267, 4
      %v895 = vsel %vm418, %v892, %v894
      %v896 = vrot.slane %v268, 4
      %v897 = vrot.slane %v269, 4
      %v898 = vsel %vm418, %v896, %v897
      %v899 = vrot.slane %v270, 4
      %v900 = vsel %vm418, %v897, %v899
      %901 = vrot.lane.b32.xlu0 %v441, 32
      %v902 = vpop.permute.xlu0 %901
      %903 = vrot.lane.b32.xlu0 %v443, 32
      %v904 = vpop.permute.xlu0 %903
      %905 = vrot.lane.b32.xlu0 %v446, 32
      %v906 = vpop.permute.xlu0 %905
      %907 = vrot.lane.b32.xlu0 %v448, 32
      %v908 = vpop.permute.xlu0 %907
      %909 = vrot.lane.b32.xlu0 %v451, 32
      %v910 = vpop.permute.xlu0 %909
      %911 = vrot.lane.b32.xlu0 %v453, 32
      %v912 = vpop.permute.xlu0 %911
      %913 = vrot.lane.b32.xlu0 %v456, 32
      %v914 = vpop.permute.xlu0 %913
      %915 = vrot.lane.b32.xlu0 %v458, 32
      %v916 = vpop.permute.xlu0 %915
      %917 = vrot.lane.b32.xlu0 %v672, 32
      %v918 = vpop.permute.xlu0 %917
      %919 = vrot.lane.b32.xlu0 %v674, 32
      %v920 = vpop.permute.xlu0 %919
      %921 = vrot.lane.b32.xlu0 %v677, 32
      %v922 = vpop.permute.xlu0 %921
      %923 = vrot.lane.b32.xlu0 %v679, 32
      %v924 = vpop.permute.xlu0 %923
      %925 = vrot.lane.b32.xlu0 %v893, 32
      %v926 = vpop.permute.xlu0 %925
      %927 = vrot.lane.b32.xlu0 %v895, 32
      %v928 = vpop.permute.xlu0 %927
      %929 = vrot.lane.b32.xlu0 %v898, 32
      %v930 = vpop.permute.xlu0 %929
      %931 = vrot.lane.b32.xlu0 %v900, 32
      %v932 = vpop.permute.xlu0 %931
      %vm949 = vcmask 294144
      %950 = vst.msk [vmem:[#allocation2] sm:$0xff] %vm949, %v902
      %951 = vst.msk [vmem:[#allocation2 + $0x8] sm:$0xff] %vm949, %v904
      %952 = vst.msk [vmem:[#allocation2 + $0x10] sm:$0xff] %vm949, %v906
      %953 = vst.msk [vmem:[#allocation2 + $0x18] sm:$0xff] %vm949, %v908
      %954 = vst.msk [vmem:[#allocation2 + $0x20] sm:$0xff] %vm949, %v910
      %955 = vst.msk [vmem:[#allocation2 + $0x28] sm:$0xff] %vm949, %v912
      %956 = vst.msk [vmem:[#allocation2 + $0x30] sm:$0xff] %vm949, %v914
      %957 = vst.msk [vmem:[#allocation2 + $0x38] sm:$0xff] %vm949, %v916
      %958 = vst.msk [vmem:[#allocation2 + $0x40] sm:$0xff] %vm949, %v918
      %959 = vst.msk [vmem:[#allocation2 + $0x48] sm:$0xff] %vm949, %v920
      %960 = vst.msk [vmem:[#allocation2 + $0x50] sm:$0xff] %vm949, %v922
      %961 = vst.msk [vmem:[#allocation2 + $0x58] sm:$0xff] %vm949, %v924
      %962 = vst.msk [vmem:[#allocation2 + $0x60] sm:$0xff] %vm949, %v926
      %963 = vst.msk [vmem:[#allocation2 + $0x68] sm:$0xff] %vm949, %v928
      %964 = vst.msk [vmem:[#allocation2 + $0x70] sm:$0xff] %vm949, %v930
      %965 = vst.msk [vmem:[#allocation2 + $0x78] sm:$0xff] %vm949, %v932
      %v966 = vld [vmem:[#allocation2] sm:$0xff]
      %v967 = vld [vmem:[#allocation2 + $0x8] sm:$0xff]
      %v968 = vld [vmem:[#allocation2 + $0x10] sm:$0xff]
      %v969 = vld [vmem:[#allocation2 + $0x18] sm:$0xff]
      %v970 = vld [vmem:[#allocation2 + $0x20] sm:$0xff]
      %v971 = vld [vmem:[#allocation2 + $0x28] sm:$0xff]
      %v972 = vld [vmem:[#allocation2 + $0x30] sm:$0xff]
      %v973 = vld [vmem:[#allocation2 + $0x38] sm:$0xff]
      %v974 = vld [vmem:[#allocation2 + $0x40] sm:$0xff]
      %v975 = vld [vmem:[#allocation2 + $0x48] sm:$0xff]
      %v976 = vld [vmem:[#allocation2 + $0x50] sm:$0xff]
      %v977 = vld [vmem:[#allocation2 + $0x58] sm:$0xff]
      %v978 = vld [vmem:[#allocation2 + $0x60] sm:$0xff]
      %v979 = vld [vmem:[#allocation2 + $0x68] sm:$0xff]
      %v980 = vld [vmem:[#allocation2 + $0x70] sm:$0xff]
      %v981 = vld [vmem:[#allocation2 + $0x78] sm:$0xff]
      %v982 = vld [vmem:[%s1] sm:$0xff]
      %v983 = vld [vmem:[%s1 + $0x8] sm:$0xff]
      %v984 = vld [vmem:[%s1 + $0x10] sm:$0xff]
      %v985 = vld [vmem:[%s1 + $0x18] sm:$0xff]
      %v986 = vld [vmem:[%s1 + $0x20] sm:$0xf]
      %v987 = vld [vmem:[%s2] sm:$0x1]
      %v989 = vlaneseq
      %v990 = vshrl.u32 %v989, 7
      %v991 = vsub.s32 0, %v990
      %v992 = vrot.slane %v987, %v991
      %vm994 = vcmask 293888
      %v996 = vsel %vm994, %v966, 0
      %v999 = vsel %vm994, %v967, 0
      %v1002 = vsel %vm994, %v968, 0
      %v1005 = vsel %vm994, %v969, 0
      %v1008 = vsel %vm994, %v970, 0
      %v1011 = vsel %vm994, %v971, 0
      %v1014 = vsel %vm994, %v972, 0
      %v1017 = vsel %vm994, %v973, 0
      %v1020 = vsel %vm994, %v974, 0
      %v1023 = vsel %vm994, %v975, 0
      %v1026 = vsel %vm994, %v976, 0
      %v1029 = vsel %vm994, %v977, 0
      %v1032 = vsel %vm994, %v978, 0
      %v1035 = vsel %vm994, %v979, 0
      %v1038 = vsel %vm994, %v980, 0
      %v1041 = vsel %vm994, %v981, 0
      %v1044 = vsel %vm418, %v986, 0
      %1046 = vmatprep.subr.mxu0 0.0
      %1047 = vmatpush1.msra.mxu0 %v982
      %1048 = vmatprep.subr.mxu0 0.0
      %1049 = vmatpush1.msra.mxu0 %v983
      %1050 = vmatprep.subr.mxu0 0.0
      %1051 = vmatpush1.msra.mxu0 %v984
      %1052 = vmatprep.subr.mxu0 0.0
      %1053 = vmatpush1.msra.mxu0 %v985
      %1054 = vmatprep.subr.mxu0 0.0
      %1055 = vmatpush1.msra.mxu0 %v1044
      %1056 = vmatprep.subr.mxu0 0.0
      %1057 = vmatpush1.msra.mxu0 0.0
      %1058 = vmatprep.subr.mxu0 0.0
      %1059 = vmatpush1.msra.mxu0 0.0
      %1060 = vmatprep.subr.mxu0 0.0
      %1061 = vmatpush1.msra.mxu0 0.0
      %1062 = vmatprep.subr.mxu0 0.0
      %1063 = vmatpush1.msra.mxu0 0.0
      %1064 = vmatprep.subr.mxu0 0.0
      %1065 = vmatpush1.msra.mxu0 0.0
      %1066 = vmatprep.subr.mxu0 0.0
      %1067 = vmatpush1.msra.mxu0 0.0
      %1068 = vmatprep.subr.mxu0 0.0
      %1069 = vmatpush1.msra.mxu0 0.0
      %1070 = vmatprep.subr.mxu0 0.0
      %1071 = vmatpush1.msra.mxu0 0.0
      %1072 = vmatprep.subr.mxu0 0.0
      %1073 = vmatpush1.msra.mxu0 0.0
      %1074 = vmatprep.subr.mxu0 0.0
      %1075 = vmatpush1.msra.mxu0 0.0
      %1076 = vmatprep.subr.mxu0 0.0
      %1077 = vmatpush1.msra.mxu0 0.0
      %1078 = vmatprep.subr.mxu0 0.0
      %1079 = vmatpush1.msra.mxu0 0.0
      %1080 = vmatprep.subr.mxu0 0.0
      %1081 = vmatpush1.msra.mxu0 0.0
      %1082 = vmatprep.subr.mxu0 0.0
      %1083 = vmatpush1.msra.mxu0 0.0
      %1084 = vmatprep.subr.mxu0 0.0
      %1085 = vmatpush1.msra.mxu0 0.0
      %1086 = vmatprep.subr.mxu0 0.0
      %1087 = vmatpush1.msra.mxu0 0.0
      %1088 = vmatprep.subr.mxu0 0.0
      %1089 = vmatpush1.msra.mxu0 0.0
      %1090 = vmatprep.subr.mxu0 0.0
      %1091 = vmatpush1.msra.mxu0 0.0
      %1092 = vmatprep.subr.mxu0 0.0
      %1093 = vmatpush1.msra.mxu0 0.0
      %1094 = vmatprep.subr.mxu0 0.0
      %1095 = vmatpush1.msra.mxu0 0.0
      %1096 = vmatprep.subr.mxu0 0.0
      %1097 = vmatpush1.msra.mxu0 0.0
      %1098 = vmatprep.subr.mxu0 0.0
      %1099 = vmatpush1.msra.mxu0 0.0
      %1100 = vmatprep.subr.mxu0 0.0
      %1101 = vmatpush1.msra.mxu0 0.0
      %1102 = vmatprep.subr.mxu0 0.0
      %1103 = vmatpush1.msra.mxu0 0.0
      %1104 = vmatprep.subr.mxu0 0.0
      %1105 = vmatpush1.msra.mxu0 0.0
      %1106 = vmatprep.subr.mxu0 0.0
      %1107 = vmatpush1.msra.mxu0 0.0
      %1108 = vmatprep.subr.mxu0 0.0
      %1109 = vmatpush1.msra.mxu0 0.0
      %1110 = vmatprep.mubr.f32.mxu0 0.0
      %1111 = vmatmul.mubr.f32.gmra.mrb[0].mxu0 %v996
      %v1112 = vpop.f32.mrb[0].mxu0
      %v1113 = vadd.f32 %v992, %v1112
      %v1114 = vpop.f32.mrb[0].mxu0
      %1115 = vmatprep.mubr.f32.mxu0 0.0
      %1116 = vmatmul.mubr.f32.gmra.mrb[0].mxu0 %v999
      %v1117 = vpop.f32.mrb[0].mxu0
      %v1118 = vadd.f32 %v992, %v1117
      %v1119 = vpop.f32.mrb[0].mxu0
      %1120 = vmatprep.mubr.f32.mxu0 0.0
      %1121 = vmatmul.mubr.f32.gmra.mrb[0].mxu0 %v1002
      %v1122 = vpop.f32.mrb[0].mxu0
      %v1123 = vadd.f32 %v992, %v1122
      %v1124 = vpop.f32.mrb[0].mxu0
      %1125 = vmatprep.mubr.f32.mxu0 0.0
      %1126 = vmatmul.mubr.f32.gmra.mrb[0].mxu0 %v1005
      %v1127 = vpop.f32.mrb[0].mxu0
      %v1128 = vadd.f32 %v992, %v1127
      %v1129 = vpop.f32.mrb[0].mxu0
      %1130 = vmatprep.mubr.f32.mxu0 0.0
      %1131 = vmatmul.mubr.f32.gmra.mrb[0].mxu0 %v1008
      %v1132 = vpop.f32.mrb[0].mxu0
      %v1133 = vadd.f32 %v992, %v1132
      %v1134 = vpop.f32.mrb[0].mxu0
      %1135 = vmatprep.mubr.f32.mxu0 0.0
      %1136 = vmatmul.mubr.f32.gmra.mrb[0].mxu0 %v1011
      %v1137 = vpop.f32.mrb[0].mxu0
      %v1138 = vadd.f32 %v992, %v1137
      %v1139 = vpop.f32.mrb[0].mxu0
      %1140 = vmatprep.mubr.f32.mxu0 0.0
      %1141 = vmatmul.mubr.f32.gmra.mrb[0].mxu0 %v1014
      %v1142 = vpop.f32.mrb[0].mxu0
      %v1143 = vadd.f32 %v992, %v1142
      %v1144 = vpop.f32.mrb[0].mxu0
      %1145 = vmatprep.mubr.f32.mxu0 0.0
      %1146 = vmatmul.mubr.f32.gmra.mrb[0].mxu0 %v1017
      %v1147 = vpop.f32.mrb[0].mxu0
      %v1148 = vadd.f32 %v992, %v1147
      %v1149 = vpop.f32.mrb[0].mxu0
      %1150 = vmatprep.mubr.f32.mxu0 0.0
      %1151 = vmatmul.mubr.f32.gmra.mrb[0].mxu0 %v1020
      %v1152 = vpop.f32.mrb[0].mxu0
      %v1153 = vadd.f32 %v992, %v1152
      %v1154 = vpop.f32.mrb[0].mxu0
      %1155 = vmatprep.mubr.f32.mxu0 0.0
      %1156 = vmatmul.mubr.f32.gmra.mrb[0].mxu0 %v1023
      %v1157 = vpop.f32.mrb[0].mxu0
      %v1158 = vadd.f32 %v992, %v1157
      %v1159 = vpop.f32.mrb[0].mxu0
      %1160 = vmatprep.mubr.f32.mxu0 0.0
      %1161 = vmatmul.mubr.f32.gmra.mrb[0].mxu0 %v1026
      %v1162 = vpop.f32.mrb[0].mxu0
      %v1163 = vadd.f32 %v992, %v1162
      %v1164 = vpop.f32.mrb[0].mxu0
      %1165 = vmatprep.mubr.f32.mxu0 0.0
      %1166 = vmatmul.mubr.f32.gmra.mrb[0].mxu0 %v1029
      %v1167 = vpop.f32.mrb[0].mxu0
      %v1168 = vadd.f32 %v992, %v1167
      %v1169 = vpop.f32.mrb[0].mxu0
      %1170 = vmatprep.mubr.f32.mxu0 0.0
      %1171 = vmatmul.mubr.f32.gmra.mrb[0].mxu0 %v1032
      %v1172 = vpop.f32.mrb[0].mxu0
      %v1173 = vadd.f32 %v992, %v1172
      %v1174 = vpop.f32.mrb[0].mxu0
      %1175 = vmatprep.mubr.f32.mxu0 0.0
      %1176 = vmatmul.mubr.f32.gmra.mrb[0].mxu0 %v1035
      %v1177 = vpop.f32.mrb[0].mxu0
      %v1178 = vadd.f32 %v992, %v1177
      %v1179 = vpop.f32.mrb[0].mxu0
      %1180 = vmatprep.mubr.f32.mxu0 0.0
      %1181 = vmatmul.mubr.f32.gmra.mrb[0].mxu0 %v1038
      %v1182 = vpop.f32.mrb[0].mxu0
      %v1183 = vadd.f32 %v992, %v1182
      %v1184 = vpop.f32.mrb[0].mxu0
      %1185 = vmatprep.mubr.f32.mxu0 0.0
      %1186 = vmatmul.mubr.f32.gmra.mrb[0].mxu0 %v1041
      %v1187 = vpop.f32.mrb[0].mxu0
      %v1188 = vadd.f32 %v992, %v1187
      %v1189 = vpop.f32.mrb[0].mxu0
      %1190 = vdwg.mxu0
      %vm1191 = vcmask 64512
      %1192 = vst.msk [vmem:[%s194] sm:$0xff] %vm1191, %v1113
      %1193 = vst.msk [vmem:[%s194 + $0x8] sm:$0xff] %vm1191, %v1118
      %1194 = vst.msk [vmem:[%s194 + $0x10] sm:$0xff] %vm1191, %v1123
      %1195 = vst.msk [vmem:[%s194 + $0x18] sm:$0xff] %vm1191, %v1128
      %1196 = vst.msk [vmem:[%s194 + $0x20] sm:$0xff] %vm1191, %v1133
      %1197 = vst.msk [vmem:[%s194 + $0x28] sm:$0xff] %vm1191, %v1138
      %1198 = vst.msk [vmem:[%s194 + $0x30] sm:$0xff] %vm1191, %v1143
      %1199 = vst.msk [vmem:[%s194 + $0x38] sm:$0xff] %vm1191, %v1148
      %1200 = vst.msk [vmem:[%s194 + $0x40] sm:$0xff] %vm1191, %v1153
      %1201 = vst.msk [vmem:[%s194 + $0x48] sm:$0xff] %vm1191, %v1158
      %1202 = vst.msk [vmem:[%s194 + $0x50] sm:$0xff] %vm1191, %v1163
      %1203 = vst.msk [vmem:[%s194 + $0x58] sm:$0xff] %vm1191, %v1168
      %1204 = vst.msk [vmem:[%s194 + $0x60] sm:$0xff] %vm1191, %v1173
      %1205 = vst.msk [vmem:[%s194 + $0x68] sm:$0xff] %vm1191, %v1178
      %1206 = vst.msk [vmem:[%s194 + $0x70] sm:$0xff] %vm1191, %v1183
      %1207 = vst.msk [vmem:[%s194 + $0x78] sm:$0xff] %vm1191, %v1188
      %s1208 = smul.u32 8, %s19
      %p1209 = scmp.lt.s32.totalorder %s18, 1
      %s1210 = scalar_select %p1209, %s18, 1
      %p1211 = scmp.lt.s32.totalorder %s1208, 15
      %s1212 = scalar_select %p1211, %s1208, 15
      %s1213 = smul.addr %s1212, 2
      %s1214 = smul.addr %s1210, 32
      %s1215 = sadd.s32 %s1213, %s1214
      %s1216 = smul.addr %s1215, 8
      %s1217 = scalar_lea.vmem %s3, %s1216
      // Predicated region
      $region33: #{dil_conv_forward.1} parent=31 // pred_check
        %p1218 = pneg %p114
      $region34: #{dil_conv_forward.1} parent=31 // pred_check_branch
        %1220 = sbr.rel (%p1218) target = $region36
      $region35: #{dil_conv_forward.1} parent=31 // pred_region
        %s1221 = smul.u32 8, %s19
      $region36: #{dil_conv_forward.1} parent=31 // pred_fallthru
        _
    $region32: #{dil_conv_forward.1} parent=5 // pred_fallthru
      _
    %p1222 = scmp.le.s32.totalorder 2, %s9
    // Predicated region
    $region37: #{dil_conv_forward.1} parent=5 // pred_check
      %p1223 = pneg %p1222
    $region38: #{dil_conv_forward.1} parent=5 // pred_check_branch
      %1225 = sbr.rel (%p1223) target = $region40
    $region39: #{dil_conv_forward.1} parent=5 // pred_region
      %s1226 = ssub.s32 %s9, 2
      // Predicated region
      $region41: #{dil_conv_forward.1} parent=39 // pred_check
        %p1227 = pneg %p120
      $region42: #{dil_conv_forward.1} parent=39 // pred_check_branch
        %1229 = sbr.rel (%p1227) target = $region44
      $region43: #{dil_conv_forward.1} parent=39 // pred_region
        %s1230 = smul.u32 8, %s21
        %p1231 = scmp.lt.s32.totalorder %s20, 1
        %s1232 = scalar_select %p1231, %s20, 1
        %p1233 = scmp.lt.s32.totalorder %s1230, 15
        %s1234 = scalar_select %p1233, %s1230, 15
        %s1235 = smul.addr %s1234, 2
        %s1236 = smul.addr %s1232, 32
        %s1237 = sadd.s32 %s1235, %s1236
        %s1238 = smul.addr %s1237, 8
        %s1239 = scalar_lea.vmem %s3, %s1238
      $region44: #{dil_conv_forward.1} parent=39 // pred_fallthru
        _
    $region40: #{dil_conv_forward.1} parent=5 // pred_fallthru
      _
  $region6: #{dil_conv_forward.1} parent=0 // loop_footer
    %s13 = sadd.s32 1, %s9
  $region7: #{dil_conv_forward.1} parent=0 // loop_footer_branch
    %8 = sbr.rel target = $region3
  $region8: #{dil_conv_forward.1} parent=0 // loop_exit
    _

</llo_original>
